<compile_context>
chip_gen: v7x
topology: tpu7x:2x2x1
jax: 0.10.0
libtpu: 0.0.40
codegen_flags: <defaults>
</compile_context>

<pallas_src>
import functools
from typing import List

import jax
import jax.numpy as jnp
from jax.experimental import pallas as pl
from jax.experimental.pallas import tpu as pltpu

LANE = 128


def _round_up(n: int, m: int) -> int:
    return ((n + m - 1) // m) * m


def _activation(name: str):
    acts = {
        "relu": lambda x: jnp.maximum(x, 0.0),
        "tanh": jnp.tanh,
        "sigmoid": jax.nn.sigmoid,
        "leaky_relu": lambda x: jnp.where(x >= 0, x, 0.01 * x),
        "elu": lambda x: jnp.where(x >= 0, x, jnp.exp(x) - 1.0),
        "swish": lambda x: x * jax.nn.sigmoid(x),
        "gelu": jax.nn.gelu,
    }
    return acts.get(name, acts["relu"])


def _mlp_kernel(*refs, num_hidden: int, activation: str, layer_norm: bool,
                ln_logical_dims):
    # ref ordering: x_tile, then per hidden layer (w, b[, gamma, beta]),
    # then (w_out, b_out), out_tile.
    x_ref = refs[0]
    out_ref = refs[-1]
    params = refs[1:-1]
    act = _activation(activation)
    per_layer = 4 if layer_norm else 2

    h = x_ref[...].astype(jnp.float32)
    idx = 0
    for layer in range(num_hidden):
        w = params[idx][...]           # bf16 (d_in_pad, d_out_pad), padded rows/cols = 0
        b = params[idx + 1][...]       # f32  (1, d_out_pad), padded cols = 0
        # bf16 into the MXU, f32 accumulation.
        h = jnp.dot(h.astype(jnp.bfloat16), w,
                    preferred_element_type=jnp.float32) + b
        if layer_norm:
            gamma = params[idx + 2][...]   # padded cols = 0
            beta = params[idx + 3][...]    # padded cols = 0
            d_inv = 1.0 / float(ln_logical_dims[layer])
            # Padded lanes of h are exactly zero (zero weight cols + zero bias),
            # so sums over the padded width equal sums over the logical width.
            s1 = jnp.sum(h, axis=-1, keepdims=True)
            s2 = jnp.sum(h * h, axis=-1, keepdims=True)
            mu = s1 * d_inv
            var = jnp.maximum(s2 * d_inv - mu * mu, 0.0)
            h = (h - mu) * jax.lax.rsqrt(var + 1e-5) * gamma + beta
        h = act(h)
        # dropout == 0.0 -> identity (inference semantics)
        idx += per_layer

    w_out = params[idx][...]
    b_out = params[idx + 1][...]
    out_ref[...] = (jnp.dot(h.astype(jnp.bfloat16), w_out,
                            preferred_element_type=jnp.float32)
                    + b_out).astype(out_ref.dtype)


def policy_network_forward(x, params, *, activation: str = "relu",
                           layer_norm: bool = False, batch_tile: int = 256):
    """x: (batch, input_dim) f32.  params: unpadded f32 arrays ordered as
    [W1, b1, (g1, beta1,)] * num_hidden + [W_out, b_out], W stored (in, out)."""
    per_layer = 4 if layer_norm else 2
    num_hidden = (len(params) - 2) // per_layer
    batch, input_dim = x.shape
    output_dim = params[-1].shape[-1]

    # ---------------- lane-dense padding of feature dims -------------------
    dims = [input_dim]
    idx = 0
    for _ in range(num_hidden):
        dims.append(params[idx].shape[1])
        idx += per_layer
    dims.append(output_dim)
    pdims = [_round_up(d, LANE) for d in dims]

    padded_params = []
    ln_logical = []
    idx = 0
    for layer in range(num_hidden):
        w, b = params[idx], params[idx + 1]
        din, dout = dims[layer], dims[layer + 1]
        pin, pout = pdims[layer], pdims[layer + 1]
        wp = jnp.zeros((pin, pout), jnp.bfloat16).at[:din, :dout].set(
            w.astype(jnp.bfloat16))
        bp = jnp.zeros((1, pout), jnp.float32).at[:, :dout].set(b)
        padded_params += [wp, bp]
        if layer_norm:
            gp = jnp.zeros((1, pout), jnp.float32).at[:, :dout].set(params[idx + 2])
            btp = jnp.zeros((1, pout), jnp.float32).at[:, :dout].set(params[idx + 3])
            padded_params += [gp, btp]
        ln_logical.append(dout)
        idx += per_layer
    w, b = params[idx], params[idx + 1]
    din, dout = dims[-2], dims[-1]
    pin, pout = pdims[-2], pdims[-1]
    padded_params += [
        jnp.zeros((pin, pout), jnp.bfloat16).at[:din, :dout].set(
            w.astype(jnp.bfloat16)),
        jnp.zeros((1, pout), jnp.float32).at[:, :dout].set(b),
    ]

    # ---------------- batch tiling / padding --------------------------------
    tb = min(batch_tile, _round_up(batch, 8))   # multiple of 8 (sublane) always
    bpad = _round_up(batch, tb)
    xp = jnp.zeros((bpad, pdims[0]), x.dtype).at[:batch, :input_dim].set(x)

    kernel = functools.partial(
        _mlp_kernel, num_hidden=num_hidden, activation=activation,
        layer_norm=layer_norm, ln_logical_dims=tuple(ln_logical))

    grid = (bpad // tb,)
    in_specs = [pl.BlockSpec((tb, pdims[0]), lambda i: (i, 0))]
    for p in padded_params:
        # Weights/biases: full-array block, constant index_map -> VMEM-resident
        # across all grid steps (no re-DMA per batch tile).
        in_specs.append(
            pl.BlockSpec(p.shape, (lambda nd: (lambda i: (0,) * nd))(p.ndim)))

    out = pl.pallas_call(
        kernel,
        out_shape=jax.ShapeDtypeStruct((bpad, pdims[-1]), x.dtype),
        grid=grid,
        in_specs=in_specs,
        out_specs=pl.BlockSpec((tb, pdims[-1]), lambda i: (i, 0)),
        compiler_params=pltpu.CompilerParams(
            dimension_semantics=("parallel",),
            vmem_limit_bytes=32 << 20),
    )(xp, *padded_params)
    return out[:batch, :output_dim]


def init_params(key, input_dim: int, output_dim: int,
                hidden_dims: List[int], layer_norm: bool = False):
    """nn.Linear-style init (uniform +/- 1/sqrt(fan_in)); weights stored (in, out)."""
    params = []
    dims = [input_dim] + list(hidden_dims)
    for i in range(len(hidden_dims)):
        fan_in, fan_out = dims[i], dims[i + 1]
        key, kw, kb = jax.random.split(key, 3)
        bound = 1.0 / jnp.sqrt(fan_in)
        params += [
            jax.random.uniform(kw, (fan_in, fan_out), jnp.float32, -bound, bound),
            jax.random.uniform(kb, (1, fan_out), jnp.float32, -bound, bound),
        ]
        if layer_norm:
            params += [jnp.ones((1, fan_out), jnp.float32),
                       jnp.zeros((1, fan_out), jnp.float32)]
    fan_in = hidden_dims[-1]
    key, kw, kb = jax.random.split(key, 3)
    bound = 1.0 / jnp.sqrt(fan_in)
    params += [
        jax.random.uniform(kw, (fan_in, output_dim), jnp.float32, -bound, bound),
        jax.random.uniform(kb, (1, output_dim), jnp.float32, -bound, bound),
    ]
    return params


def reference_forward(x, params, *, activation="relu", layer_norm=False):
    """Pure-JAX reference with the same numerics (bf16 at the dot, f32 accum)."""
    act = _activation(activation)
    per_layer = 4 if layer_norm else 2
    num_hidden = (len(params) - 2) // per_layer
    h = x.astype(jnp.float32)
    idx = 0
    for _ in range(num_hidden):
        h = jnp.dot(h.astype(jnp.bfloat16), params[idx].astype(jnp.bfloat16),
                    preferred_element_type=jnp.float32) + params[idx + 1]
        if layer_norm:
            mu = jnp.mean(h, -1, keepdims=True)
            var = jnp.mean((h - mu) ** 2, -1, keepdims=True)
            h = (h - mu) / jnp.sqrt(var + 1e-5) * params[idx + 2] + params[idx + 3]
        h = act(h)
        idx += per_layer
    return jnp.dot(h.astype(jnp.bfloat16), params[idx].astype(jnp.bfloat16),
                   preferred_element_type=jnp.float32) + params[idx + 1]


if __name__ == "__main__":
    # Module-default hidden dims [256, 256]; small RL-ish input/output widths.
    # Batch many policy states into one call (grid of 2 batch tiles of 128).
    batch, input_dim, output_dim = 256, 16, 8
    hidden_dims = [256, 256]

    key = jax.random.PRNGKey(0)
    key, kx = jax.random.split(key)
    x = jax.random.normal(kx, (batch, input_dim), jnp.float32)

    # Case 1: module defaults (relu, no LayerNorm).
    p1 = init_params(key, input_dim, output_dim, hidden_dims, layer_norm=False)
    out1 = jax.block_until_ready(
        policy_network_forward(x, p1, activation="relu", layer_norm=False,
                               batch_tile=128))
    ref1 = reference_forward(x, p1, activation="relu", layer_norm=False)
    assert out1.shape == (batch, output_dim)
    assert jnp.allclose(out1, ref1, atol=2e-3, rtol=2e-3)

    # Case 2: LayerNorm + tanh (exercises the masked-padding LayerNorm path).
    key, k2 = jax.random.split(key)
    p2 = init_params(k2, input_dim, output_dim, hidden_dims, layer_norm=True)
    out2 = jax.block_until_ready(
        policy_network_forward(x, p2, activation="tanh", layer_norm=True,
                               batch_tile=128))
    ref2 = reference_forward(x, p2, activation="tanh", layer_norm=True)
    assert out2.shape == (batch, output_dim)
    assert jnp.allclose(out2, ref2, atol=2e-3, rtol=2e-3)

    print("KERNEL_OK")
</pallas_src>

<mosaic_0001>
module attributes {stable_mosaic.version = 11 : i64} {
  func.func @_mlp_kernel(%arg0: i32, %arg1: memref<128x128xf32, #tpu.memory_space<vmem>>, %arg2: memref<128x256xbf16, #tpu.memory_space<vmem>>, %arg3: memref<1x256xf32, #tpu.memory_space<vmem>>, %arg4: memref<256x256xbf16, #tpu.memory_space<vmem>>, %arg5: memref<1x256xf32, #tpu.memory_space<vmem>>, %arg6: memref<256x128xbf16, #tpu.memory_space<vmem>>, %arg7: memref<1x128xf32, #tpu.memory_space<vmem>>, %arg8: memref<128x128xf32, #tpu.memory_space<vmem>>) attributes {dimension_semantics = [#tpu.dimension_semantics<parallel>], iteration_bounds = array<i64: 2>, scalar_prefetch = 0 : i64, scratch_operands = 0 : i64, tpu.core_type = #tpu.core_type<tc>, window_params = [{transform_indices = @transform_0, window_bounds = array<i64: 128, 128>}, {pipeline_mode = #tpu.pipeline_mode<synchronous>, transform_indices = @transform_1, window_bounds = array<i64: 128, 256>}, {pipeline_mode = #tpu.pipeline_mode<synchronous>, transform_indices = @transform_2, window_bounds = array<i64: 1, 256>}, {pipeline_mode = #tpu.pipeline_mode<synchronous>, transform_indices = @transform_3, window_bounds = array<i64: 256, 256>}, {pipeline_mode = #tpu.pipeline_mode<synchronous>, transform_indices = @transform_4, window_bounds = array<i64: 1, 256>}, {pipeline_mode = #tpu.pipeline_mode<synchronous>, transform_indices = @transform_5, window_bounds = array<i64: 256, 128>}, {pipeline_mode = #tpu.pipeline_mode<synchronous>, transform_indices = @transform_6, window_bounds = array<i64: 1, 128>}, {transform_indices = @transform_7, window_bounds = array<i64: 128, 128>}]} {
    %c0 = arith.constant 0 : index
    %c0_0 = arith.constant 0 : index
    %0 = vector.load %arg1[%c0, %c0_0] : memref<128x128xf32, #tpu.memory_space<vmem>>, vector<128x128xf32>
    %c0_1 = arith.constant 0 : index
    %c0_2 = arith.constant 0 : index
    %1 = vector.load %arg2[%c0_1, %c0_2] : memref<128x256xbf16, #tpu.memory_space<vmem>>, vector<128x256xbf16>
    %c0_3 = arith.constant 0 : index
    %c0_4 = arith.constant 0 : index
    %2 = vector.load %arg3[%c0_3, %c0_4] : memref<1x256xf32, #tpu.memory_space<vmem>>, vector<1x256xf32>
    %3 = arith.truncf %0 : vector<128x128xf32> to vector<128x128xbf16>
    %cst = arith.constant dense<0.000000e+00> : vector<128x256xf32>
    %4 = tpu.matmul %3, %1, %cst {dimension_numbers = #tpu.dot_dimension_numbers<[1], [0], [0], [1], [0, 0, 1, 1], [], []>} : vector<128x128xbf16>, vector<128x256xbf16>, vector<128x256xf32> -> vector<128x256xf32>
    %5 = vector.broadcast %2 : vector<1x256xf32> to vector<128x256xf32>
    %6 = arith.addf %4, %5 : vector<128x256xf32>
    %cst_5 = arith.constant 0.000000e+00 : f32
    %7 = vector.broadcast %cst_5 : f32 to vector<128x256xf32>
    %8 = arith.maximumf %6, %7 : vector<128x256xf32>
    %c0_6 = arith.constant 0 : index
    %c0_7 = arith.constant 0 : index
    %9 = vector.load %arg4[%c0_6, %c0_7] : memref<256x256xbf16, #tpu.memory_space<vmem>>, vector<256x256xbf16>
    %c0_8 = arith.constant 0 : index
    %c0_9 = arith.constant 0 : index
    %10 = vector.load %arg5[%c0_8, %c0_9] : memref<1x256xf32, #tpu.memory_space<vmem>>, vector<1x256xf32>
    %11 = arith.truncf %8 : vector<128x256xf32> to vector<128x256xbf16>
    %cst_10 = arith.constant dense<0.000000e+00> : vector<128x256xf32>
    %12 = tpu.matmul %11, %9, %cst_10 {dimension_numbers = #tpu.dot_dimension_numbers<[1], [0], [0], [1], [0, 0, 1, 1], [], []>} : vector<128x256xbf16>, vector<256x256xbf16>, vector<128x256xf32> -> vector<128x256xf32>
    %13 = vector.broadcast %10 : vector<1x256xf32> to vector<128x256xf32>
    %14 = arith.addf %12, %13 : vector<128x256xf32>
    %cst_11 = arith.constant 0.000000e+00 : f32
    %15 = vector.broadcast %cst_11 : f32 to vector<128x256xf32>
    %16 = arith.maximumf %14, %15 : vector<128x256xf32>
    %c0_12 = arith.constant 0 : index
    %c0_13 = arith.constant 0 : index
    %17 = vector.load %arg6[%c0_12, %c0_13] : memref<256x128xbf16, #tpu.memory_space<vmem>>, vector<256x128xbf16>
    %c0_14 = arith.constant 0 : index
    %c0_15 = arith.constant 0 : index
    %18 = vector.load %arg7[%c0_14, %c0_15] : memref<1x128xf32, #tpu.memory_space<vmem>>, vector<1x128xf32>
    %19 = arith.truncf %16 : vector<128x256xf32> to vector<128x256xbf16>
    %cst_16 = arith.constant dense<0.000000e+00> : vector<128x128xf32>
    %20 = tpu.matmul %19, %17, %cst_16 {dimension_numbers = #tpu.dot_dimension_numbers<[1], [0], [0], [1], [0, 0, 1, 1], [], []>} : vector<128x256xbf16>, vector<256x128xbf16>, vector<128x128xf32> -> vector<128x128xf32>
    %21 = vector.broadcast %18 : vector<1x128xf32> to vector<128x128xf32>
    %22 = arith.addf %20, %21 : vector<128x128xf32>
    %c0_17 = arith.constant 0 : index
    %c0_18 = arith.constant 0 : index
    %23 = vector.load %arg8[%c0_17, %c0_18] : memref<128x128xf32, #tpu.memory_space<vmem>>, vector<128x128xf32>
    tpu.vector_store %arg8[%c0_17, %c0_18], %22 {strides = array<i32>} : memref<128x128xf32, #tpu.memory_space<vmem>>, vector<128x128xf32>,
    return
  }
  func.func @transform_0(%arg0: i32) -> (i32, i32) {
    %c0_i32 = arith.constant 0 : i32
    %c0_i32_0 = arith.constant 0 : i32
    return %arg0, %c0_i32 : i32, i32
  }
  func.func @transform_1(%arg0: i32) -> (i32, i32) {
    %c0_i32 = arith.constant 0 : i32
    %c0_i32_0 = arith.constant 0 : i32
    %c0_i32_1 = arith.constant 0 : i32
    return %c0_i32, %c0_i32_0 : i32, i32
  }
  func.func @transform_2(%arg0: i32) -> (i32, i32) {
    %c0_i32 = arith.constant 0 : i32
    %c0_i32_0 = arith.constant 0 : i32
    %c0_i32_1 = arith.constant 0 : i32
    return %c0_i32, %c0_i32_0 : i32, i32
  }
  func.func @transform_3(%arg0: i32) -> (i32, i32) {
    %c0_i32 = arith.constant 0 : i32
    %c0_i32_0 = arith.constant 0 : i32
    %c0_i32_1 = arith.constant 0 : i32
    return %c0_i32, %c0_i32_0 : i32, i32
  }
  func.func @transform_4(%arg0: i32) -> (i32, i32) {
    %c0_i32 = arith.constant 0 : i32
    %c0_i32_0 = arith.constant 0 : i32
    %c0_i32_1 = arith.constant 0 : i32
    return %c0_i32, %c0_i32_0 : i32, i32
  }
  func.func @transform_5(%arg0: i32) -> (i32, i32) {
    %c0_i32 = arith.constant 0 : i32
    %c0_i32_0 = arith.constant 0 : i32
    %c0_i32_1 = arith.constant 0 : i32
    return %c0_i32, %c0_i32_0 : i32, i32
  }
  func.func @transform_6(%arg0: i32) -> (i32, i32) {
    %c0_i32 = arith.constant 0 : i32
    %c0_i32_0 = arith.constant 0 : i32
    %c0_i32_1 = arith.constant 0 : i32
    return %c0_i32, %c0_i32_0 : i32, i32
  }
  func.func @transform_7(%arg0: i32) -> (i32, i32) {
    %c0_i32 = arith.constant 0 : i32
    %c0_i32_0 = arith.constant 0 : i32
    return %arg0, %c0_i32 : i32, i32
  }
}

</mosaic_0001>

<llo_original>
// kernel: tpu_custom_call.1
$region0: #{tpu_custom_call.1}
  #allocation0 [shape = 'u32[]', space=smem, size = 0x4, offset = 0x4, fixed_abs, tag = 'smem constant byte address 0x4 - core index']
  #allocation1 [shape = 'u32[144,128]{1,0:T(1,128)}', space=vmem, size = 0x12000, scoped, tag = 'internal scratch']
  %s0 = inlined_call_operand.hbm [shape: f32[256,128], index: 0, kind: input, shape index: {}]
  %s1 = inlined_call_operand.hbm [shape: bf16[128,256], index: 1, kind: input, shape index: {}]
  %s2 = inlined_call_operand.vmem [shape: f32[1,256], index: 2, kind: input, shape index: {}]
  %s3 = inlined_call_operand.hbm [shape: bf16[256,256], index: 3, kind: input, shape index: {}]
  %s4 = inlined_call_operand.vmem [shape: f32[1,256], index: 4, kind: input, shape index: {}]
  %s5 = inlined_call_operand.hbm [shape: bf16[256,128], index: 5, kind: input, shape index: {}]
  %s6 = inlined_call_operand.vmem [shape: f32[1,128], index: 6, kind: input, shape index: {}]
  %s7 = inlined_call_operand.hbm [shape: f32[256,128], index: 7, kind: output, shape index: {}]
  %s8 = sld [smem:[#allocation0]]
  $region77: #{tpu_custom_call.1} parent=0
    _
  %s10 = ssub.s32 1, %s8
  %s11 = scalar_select 0, %s10, %s8
  $region1: #{tpu_custom_call.1} parent=0
    #allocation2 [shape = 'u8[131072]{0}', space=vmem, size = 0x20000, scoped, tag = 'input window, operand 0']
    #allocation3 [shape = 's32[2]{0}', space=sflag, size = 0x8, scoped, tag = 'scoped memory for tpu_custom_call.1']
    #allocation4 [shape = 's32[2]{0}', space=sflag, size = 0x8, scoped, tag = 'scoped memory for tpu_custom_call.1']
    #allocation5 [shape = 'u8[65536]{0}', space=vmem, size = 0x10000, scoped, tag = 'input window, operand 1, single buffered']
    #allocation6 [shape = 's32[1]{0}', space=sflag, size = 0x4, scoped, tag = 'scoped memory for tpu_custom_call.1']
    #allocation7 [shape = 'u8[131072]{0}', space=vmem, size = 0x20000, scoped, tag = 'input window, operand 3, single buffered']
    #allocation8 [shape = 'u8[65536]{0}', space=vmem, size = 0x10000, scoped, tag = 'input window, operand 5, single buffered']
    #allocation9 [shape = 's32[1]{0}', space=sflag, size = 0x4, scoped, tag = 'scoped memory for tpu_custom_call.1']
    #allocation10 [shape = 'u8[131072]{0}', space=vmem, size = 0x20000, scoped, tag = 'output window, operand 0']
    %12 = vsyncpa [#allocation3], 0
    %s13 = scalar_lea.sflag [#allocation3], 1
    %14 = vsyncpa %s13, 0
    %15 = vsyncpa [#allocation6], 0
    %16 = vsyncpa [#allocation9], 0
    %17 = vsyncpa [#allocation4], 0
    %s18 = scalar_lea.sflag [#allocation4], 1
    %19 = vsyncpa %s18, 0
    loop: start=0, step=1, limit=4
    $region2: #{tpu_custom_call.1} parent=1 // loop_pre_header
      _
    $region3: #{tpu_custom_call.1} parent=1 // loop_header
      %s21 = sphi 0, %s25
      %p22 = scmp.ge.s32.totalorder %s21, 4
      %s31 = sphi 0, %s33
      %s34 = sphi 0, %s31
      %s35 = sphi 0, %s34
      %s51 = sphi 0, %s35
      %s55 = sphi 0, %s55
      %s57 = sphi 0, %s55
      %s58 = sphi 0, %s57
      %s72 = sphi 0, %s58
      %s76 = sphi 0, %s76
      %s78 = sphi 0, %s76
      %s79 = sphi 0, %s78
      %s93 = sphi 0, %s79
      %s97 = sphi 0, %s97
      %s99 = sphi 0, %s97
      %s100 = sphi 0, %s99
      %s114 = sphi 0, %s100
      %s118 = sphi 0, %s118
      %s120 = sphi 0, %s118
      %s121 = sphi 0, %s120
      %s135 = sphi 0, %s121
      %s139 = sphi 0, %s139
      %s141 = sphi 0, %s139
      %s142 = sphi 0, %s141
      %s156 = sphi 0, %s142
      %s160 = sphi 0, %s160
      %s162 = sphi 0, %s160
      %s163 = sphi 0, %s162
      %s177 = sphi 0, %s163
      %s183 = sphi 0, %s185
      %s186 = sphi 0, %s183
      %s187 = sphi 0, %s186
      %s203 = sphi 0, %s187
    $region4: #{tpu_custom_call.1} parent=1 // loop_header_branch
      %24 = sbr.rel (%p22) target = $region8
    $region5: #{tpu_custom_call.1} parent=1 // loop_body
      %s26 = ssub.s32 %s21, 1
      %s27 = ssub.s32 %s21, 2
      %s28 = sadd.s32 %s21, 1
      %s29 = ssub.s32 %s21, %s28
      %p30 = scmp.eq.s32.totalorder %s29, 0
      %s32 = sadd.s32 %s31, 1
      %s33 = scalar_select %p30, %s31, %s32
      %p36 = pneg %p30
      %p37 = scmp.eq.s32.totalorder %s21, 1
      %p38 = por %p36, %p37
      %p39 = scmp.ne.s32.totalorder %s31, %s34
      %p40 = scmp.eq.s32.totalorder %s21, 0
      %p41 = por %p39, %p40
      %p42 = scmp.ne.s32.totalorder %s31, %s34
      %p43 = scmp.eq.s32.totalorder %s26, 1
      %p44 = por %p42, %p43
      %p45 = scmp.ne.s32.totalorder %s34, %s35
      %p46 = scmp.eq.s32.totalorder %s26, 0
      %p47 = por %p45, %p46
      %p48 = scmp.ne.s32.totalorder %s34, %s35
      %p49 = scmp.eq.s32.totalorder %s27, 1
      %p50 = por %p48, %p49
      %p52 = scmp.ne.s32.totalorder %s35, %s51
      %p53 = scmp.eq.s32.totalorder %s27, 0
      %p54 = por %p52, %p53
      %s56 = sadd.s32 %s55, 1
      %p59 = scmp.eq.s32.totalorder %s21, 1
      %p60 = scmp.ne.s32.totalorder %s55, %s57
      %p61 = scmp.eq.s32.totalorder %s21, 0
      %p62 = por %p60, %p61
      %p63 = scmp.ne.s32.totalorder %s55, %s57
      %p64 = scmp.eq.s32.totalorder %s26, 1
      %p65 = por %p63, %p64
      %p66 = scmp.ne.s32.totalorder %s57, %s58
      %p67 = scmp.eq.s32.totalorder %s26, 0
      %p68 = por %p66, %p67
      %p69 = scmp.ne.s32.totalorder %s57, %s58
      %p70 = scmp.eq.s32.totalorder %s27, 1
      %p71 = por %p69, %p70
      %p73 = scmp.ne.s32.totalorder %s58, %s72
      %p74 = scmp.eq.s32.totalorder %s27, 0
      %p75 = por %p73, %p74
      %s77 = sadd.s32 %s76, 1
      %p80 = scmp.eq.s32.totalorder %s21, 1
      %p81 = scmp.ne.s32.totalorder %s76, %s78
      %p82 = scmp.eq.s32.totalorder %s21, 0
      %p83 = por %p81, %p82
      %p84 = scmp.ne.s32.totalorder %s76, %s78
      %p85 = scmp.eq.s32.totalorder %s26, 1
      %p86 = por %p84, %p85
      %p87 = scmp.ne.s32.totalorder %s78, %s79
      %p88 = scmp.eq.s32.totalorder %s26, 0
      %p89 = por %p87, %p88
      %p90 = scmp.ne.s32.totalorder %s78, %s79
      %p91 = scmp.eq.s32.totalorder %s27, 1
      %p92 = por %p90, %p91
      %p94 = scmp.ne.s32.totalorder %s79, %s93
      %p95 = scmp.eq.s32.totalorder %s27, 0
      %p96 = por %p94, %p95
      %s98 = sadd.s32 %s97, 1
      %p101 = scmp.eq.s32.totalorder %s21, 1
      %p102 = scmp.ne.s32.totalorder %s97, %s99
      %p103 = scmp.eq.s32.totalorder %s21, 0
      %p104 = por %p102, %p103
      %p105 = scmp.ne.s32.totalorder %s97, %s99
      %p106 = scmp.eq.s32.totalorder %s26, 1
      %p107 = por %p105, %p106
      %p108 = scmp.ne.s32.totalorder %s99, %s100
      %p109 = scmp.eq.s32.totalorder %s26, 0
      %p110 = por %p108, %p109
      %p111 = scmp.ne.s32.totalorder %s99, %s100
      %p112 = scmp.eq.s32.totalorder %s27, 1
      %p113 = por %p111, %p112
      %p115 = scmp.ne.s32.totalorder %s100, %s114
      %p116 = scmp.eq.s32.totalorder %s27, 0
      %p117 = por %p115, %p116
      %s119 = sadd.s32 %s118, 1
      %p122 = scmp.eq.s32.totalorder %s21, 1
      %p123 = scmp.ne.s32.totalorder %s118, %s120
      %p124 = scmp.eq.s32.totalorder %s21, 0
      %p125 = por %p123, %p124
      %p126 = scmp.ne.s32.totalorder %s118, %s120
      %p127 = scmp.eq.s32.totalorder %s26, 1
      %p128 = por %p126, %p127
      %p129 = scmp.ne.s32.totalorder %s120, %s121
      %p130 = scmp.eq.s32.totalorder %s26, 0
      %p131 = por %p129, %p130
      %p132 = scmp.ne.s32.totalorder %s120, %s121
      %p133 = scmp.eq.s32.totalorder %s27, 1
      %p134 = por %p132, %p133
      %p136 = scmp.ne.s32.totalorder %s121, %s135
      %p137 = scmp.eq.s32.totalorder %s27, 0
      %p138 = por %p136, %p137
      %s140 = sadd.s32 %s139, 1
      %p143 = scmp.eq.s32.totalorder %s21, 1
      %p144 = scmp.ne.s32.totalorder %s139, %s141
      %p145 = scmp.eq.s32.totalorder %s21, 0
      %p146 = por %p144, %p145
      %p147 = scmp.ne.s32.totalorder %s139, %s141
      %p148 = scmp.eq.s32.totalorder %s26, 1
      %p149 = por %p147, %p148
      %p150 = scmp.ne.s32.totalorder %s141, %s142
      %p151 = scmp.eq.s32.totalorder %s26, 0
      %p152 = por %p150, %p151
      %p153 = scmp.ne.s32.totalorder %s141, %s142
      %p154 = scmp.eq.s32.totalorder %s27, 1
      %p155 = por %p153, %p154
      %p157 = scmp.ne.s32.totalorder %s142, %s156
      %p158 = scmp.eq.s32.totalorder %s27, 0
      %p159 = por %p157, %p158
      %s161 = sadd.s32 %s160, 1
      %p164 = scmp.eq.s32.totalorder %s21, 1
      %p165 = scmp.ne.s32.totalorder %s160, %s162
      %p166 = scmp.eq.s32.totalorder %s21, 0
      %p167 = por %p165, %p166
      %p168 = scmp.ne.s32.totalorder %s160, %s162
      %p169 = scmp.eq.s32.totalorder %s26, 1
      %p170 = por %p168, %p169
      %p171 = scmp.ne.s32.totalorder %s162, %s163
      %p172 = scmp.eq.s32.totalorder %s26, 0
      %p173 = por %p171, %p172
      %p174 = scmp.ne.s32.totalorder %s162, %s163
      %p175 = scmp.eq.s32.totalorder %s27, 1
      %p176 = por %p174, %p175
      %p178 = scmp.ne.s32.totalorder %s163, %s177
      %p179 = scmp.eq.s32.totalorder %s27, 0
      %p180 = por %p178, %p179
      %s181 = ssub.s32 %s21, %s28
      %p182 = scmp.eq.s32.totalorder %s181, 0
      %s184 = sadd.s32 %s183, 1
      %s185 = scalar_select %p182, %s183, %s184
      %p188 = pneg %p182
      %p189 = scmp.eq.s32.totalorder %s21, 1
      %p190 = por %p188, %p189
      %p191 = scmp.ne.s32.totalorder %s183, %s186
      %p192 = scmp.eq.s32.totalorder %s21, 0
      %p193 = por %p191, %p192
      %p194 = scmp.ne.s32.totalorder %s183, %s186
      %p195 = scmp.eq.s32.totalorder %s26, 1
      %p196 = por %p194, %p195
      %p197 = scmp.ne.s32.totalorder %s186, %s187
      %p198 = scmp.eq.s32.totalorder %s26, 0
      %p199 = por %p197, %p198
      %p200 = scmp.ne.s32.totalorder %s186, %s187
      %p201 = scmp.eq.s32.totalorder %s27, 1
      %p202 = por %p200, %p201
      %p204 = scmp.ne.s32.totalorder %s187, %s203
      %p205 = scmp.eq.s32.totalorder %s27, 0
      %p206 = por %p204, %p205
      %p207 = scmp.le.s32.totalorder 1, %s21
      %p208 = scmp.lt.s32.totalorder %s21, 3
      %p209 = pnand %p207, %p208
      %p210 = pneg %p209
      // Predicated region
      $region9: #{tpu_custom_call.1} parent=5 // pred_check
        _
      $region10: #{tpu_custom_call.1} parent=5 // pred_check_branch
        %212 = sbr.rel (%p209) target = $region12
      $region11: #{tpu_custom_call.1} parent=5 // pred_region
        %s213 = ssub.s32 %s21, 1
        // Predicated region
        $region13: #{tpu_custom_call.1} parent=11 // pred_check
          %p214 = pneg %p68
        $region14: #{tpu_custom_call.1} parent=11 // pred_check_branch
          %216 = sbr.rel (%p214) target = $region16
        $region15: #{tpu_custom_call.1} parent=11 // pred_region
          %s218 = ssub.s32 2048, 2048
          %219 = vsyncadd [#allocation6], %s218
          %s220 = sshll.u32 [#allocation5], 4
          %s221 = int_to_ptr.vmem [resolvable:$true] %s220
          %226 = dma.hbm_to_vmem [thread:$0]  %s1, 2048, %s221, [#allocation6], 128, 128, 8
        $region16: #{tpu_custom_call.1} parent=11 // pred_fallthru
          _
        // Predicated region
        $region17: #{tpu_custom_call.1} parent=11 // pred_check
          %p227 = pneg %p89
        $region18: #{tpu_custom_call.1} parent=11 // pred_check_branch
          %229 = sbr.rel (%p227) target = $region20
        $region19: #{tpu_custom_call.1} parent=11 // pred_region
          _
        $region20: #{tpu_custom_call.1} parent=11 // pred_fallthru
          _
        // Predicated region
        $region21: #{tpu_custom_call.1} parent=11 // pred_check
          %p230 = pneg %p110
        $region22: #{tpu_custom_call.1} parent=11 // pred_check_branch
          %232 = sbr.rel (%p230) target = $region24
        $region23: #{tpu_custom_call.1} parent=11 // pred_region
          %s234 = ssub.s32 4096, 4096
          %235 = vsyncadd [#allocation6], %s234
          %s236 = sshll.u32 [#allocation7], 4
          %s237 = int_to_ptr.vmem [resolvable:$true] %s236
          %242 = dma.hbm_to_vmem [thread:$0]  %s3, 4096, %s237, [#allocation6], 128, 128, 8
        $region24: #{tpu_custom_call.1} parent=11 // pred_fallthru
          _
        // Predicated region
        $region25: #{tpu_custom_call.1} parent=11 // pred_check
          %p243 = pneg %p131
        $region26: #{tpu_custom_call.1} parent=11 // pred_check_branch
          %245 = sbr.rel (%p243) target = $region28
        $region27: #{tpu_custom_call.1} parent=11 // pred_region
          _
        $region28: #{tpu_custom_call.1} parent=11 // pred_fallthru
          _
        // Predicated region
        $region29: #{tpu_custom_call.1} parent=11 // pred_check
          %p246 = pneg %p152
        $region30: #{tpu_custom_call.1} parent=11 // pred_check_branch
          %248 = sbr.rel (%p246) target = $region32
        $region31: #{tpu_custom_call.1} parent=11 // pred_region
          %s250 = ssub.s32 2048, 2048
          %251 = vsyncadd [#allocation9], %s250
          %s252 = sshll.u32 [#allocation8], 4
          %s253 = int_to_ptr.vmem [resolvable:$true] %s252
          %258 = dma.hbm_to_vmem [thread:$0]  %s5, 2048, %s253, [#allocation9], 64, 64, 4
        $region32: #{tpu_custom_call.1} parent=11 // pred_fallthru
          _
        // Predicated region
        $region33: #{tpu_custom_call.1} parent=11 // pred_check
          %p259 = pneg %p173
        $region34: #{tpu_custom_call.1} parent=11 // pred_check_branch
          %261 = sbr.rel (%p259) target = $region36
        $region35: #{tpu_custom_call.1} parent=11 // pred_region
          _
        $region36: #{tpu_custom_call.1} parent=11 // pred_fallthru
          _
      $region12: #{tpu_custom_call.1} parent=5 // pred_fallthru
        _
      %p262 = scmp.lt.s32.totalorder %s21, 2
      // Predicated region
      $region37: #{tpu_custom_call.1} parent=5 // pred_check
        %p263 = pneg %p262
      $region38: #{tpu_custom_call.1} parent=5 // pred_check_branch
        %265 = sbr.rel (%p263) target = $region40
      $region39: #{tpu_custom_call.1} parent=5 // pred_region
        // Predicated region
        $region41: #{tpu_custom_call.1} parent=39 // pred_check
          %p266 = pneg %p41
        $region42: #{tpu_custom_call.1} parent=39 // pred_check_branch
          %268 = sbr.rel (%p266) target = $region44
        $region43: #{tpu_custom_call.1} parent=39 // pred_region
          %s269 = sand.u32 %s31, 1
          %s270 = scalar_lea.sflag [#allocation3], %s269
          %s271 = sand.u32 %s31, 1
          %s272 = smul.addr %s271, 128
          %s273 = scalar_lea.vmem [#allocation2], %s272
          %s274 = smul.u32 16, %s21
          %s276 = ssub.s32 2048, 2048
          %277 = vsyncadd %s270, %s276
          %s278 = smul.addr %s274, 128
          %s279 = scalar_lea.hbm %s0, %s278
          %s280 = sshll.u32 %s273, 4
          %s281 = int_to_ptr.vmem [resolvable:$true] %s280
          %286 = dma.hbm_to_vmem [thread:$0]  %s279, 2048, %s281, %s270, 128, 128, 8
        $region44: #{tpu_custom_call.1} parent=39 // pred_fallthru
          _
      $region40: #{tpu_custom_call.1} parent=5 // pred_fallthru
        _
      %p287 = scmp.le.s32.totalorder 1, %s21
      %p288 = scmp.lt.s32.totalorder %s21, 3
      %p289 = pnand %p287, %p288
      %p290 = pneg %p289
      // Predicated region
      $region45: #{tpu_custom_call.1} parent=5 // pred_check
        _
      $region46: #{tpu_custom_call.1} parent=5 // pred_check_branch
        %292 = sbr.rel (%p289) target = $region48
      $region47: #{tpu_custom_call.1} parent=5 // pred_region
        %s293 = ssub.s32 %s21, 1
        %s294 = sand.u32 %s34, 1
        %s295 = scalar_lea.sflag [#allocation3], %s294
        %s296 = sand.u32 %s34, 1
        %s297 = smul.addr %s296, 128
        %s298 = scalar_lea.vmem [#allocation2], %s297
        // Predicated region
        $region49: #{tpu_custom_call.1} parent=47 // pred_check
          %p299 = pneg %p47
        $region50: #{tpu_custom_call.1} parent=47 // pred_check_branch
          %301 = sbr.rel (%p299) target = $region52
        $region51: #{tpu_custom_call.1} parent=47 // pred_region
          %302 = dma.done %s295, 2048
        $region52: #{tpu_custom_call.1} parent=47 // pred_fallthru
          _
        // Predicated region
        $region53: #{tpu_custom_call.1} parent=47 // pred_check
          %p303 = pneg %p68
        $region54: #{tpu_custom_call.1} parent=47 // pred_check_branch
          %305 = sbr.rel (%p303) target = $region56
        $region55: #{tpu_custom_call.1} parent=47 // pred_region
          %306 = dma.done [#allocation6], 2048
        $region56: #{tpu_custom_call.1} parent=47 // pred_fallthru
          _
        // Predicated region
        $region57: #{tpu_custom_call.1} parent=47 // pred_check
          %p307 = pneg %p110
        $region58: #{tpu_custom_call.1} parent=47 // pred_check_branch
          %309 = sbr.rel (%p307) target = $region60
        $region59: #{tpu_custom_call.1} parent=47 // pred_region
          %310 = dma.done [#allocation6], 4096
        $region60: #{tpu_custom_call.1} parent=47 // pred_fallthru
          _
        // Predicated region
        $region61: #{tpu_custom_call.1} parent=47 // pred_check
          %p311 = pneg %p152
        $region62: #{tpu_custom_call.1} parent=47 // pred_check_branch
          %313 = sbr.rel (%p311) target = $region64
        $region63: #{tpu_custom_call.1} parent=47 // pred_region
          %314 = dma.done [#allocation9], 2048
        $region64: #{tpu_custom_call.1} parent=47 // pred_fallthru
          _
        %s315 = sand.u32 %s34, 1
        %s316 = scalar_lea.sflag [#allocation3], %s315
        %s317 = sand.u32 %s34, 1
        %s318 = smul.addr %s317, 128
        %s319 = scalar_lea.vmem [#allocation2], %s318
        %p320 = pneg %p47
        %p321 = pneg %p44
        %p322 = pneg %p68
        %p323 = pneg %p65
        %p324 = pneg %p89
        %p325 = pneg %p86
        %p326 = pneg %p110
        %p327 = pneg %p107
        %p328 = pneg %p131
        %p329 = pneg %p128
        %p330 = pneg %p152
        %p331 = pneg %p149
        %p332 = pneg %p173
        %p333 = pneg %p170
        %p334 = pneg %p199
        %p335 = pneg %p196
        %s336 = sand.u32 %s186, 1
        %s337 = scalar_lea.sflag [#allocation4], %s336
        %s338 = sand.u32 %s186, 1
        %s339 = smul.addr %s338, 128
        %s340 = scalar_lea.vmem [#allocation10], %s339
        %s341 = smul.u32 16, %s26
        %s342 = smul.u32 16, %s26
        %v344 = vld [vmem:[%s298] sm:$0xff]
        %v345 = vld [vmem:[%s298 + $0x8] sm:$0xff]
        %v346 = vld [vmem:[%s298 + $0x10] sm:$0xff]
        %v347 = vld [vmem:[%s298 + $0x18] sm:$0xff]
        %v348 = vld [vmem:[%s298 + $0x20] sm:$0xff]
        %v349 = vld [vmem:[%s298 + $0x28] sm:$0xff]
        %v350 = vld [vmem:[%s298 + $0x30] sm:$0xff]
        %v351 = vld [vmem:[%s298 + $0x38] sm:$0xff]
        %v352 = vld [vmem:[%s298 + $0x40] sm:$0xff]
        %v353 = vld [vmem:[%s298 + $0x48] sm:$0xff]
        %v354 = vld [vmem:[%s298 + $0x50] sm:$0xff]
        %v355 = vld [vmem:[%s298 + $0x58] sm:$0xff]
        %v356 = vld [vmem:[%s298 + $0x60] sm:$0xff]
        %v357 = vld [vmem:[%s298 + $0x68] sm:$0xff]
        %v358 = vld [vmem:[%s298 + $0x70] sm:$0xff]
        %v359 = vld [vmem:[%s298 + $0x78] sm:$0xff]
        %v360 = vld [vmem:[#allocation5] sm:$0xff]
        %v361 = vld [vmem:[#allocation5 + $0x8] sm:$0xff]
        %v362 = vld [vmem:[#allocation5 + $0x10] sm:$0xff]
        %v363 = vld [vmem:[#allocation5 + $0x18] sm:$0xff]
        %v364 = vld [vmem:[#allocation5 + $0x20] sm:$0xff]
        %v365 = vld [vmem:[#allocation5 + $0x28] sm:$0xff]
        %v366 = vld [vmem:[#allocation5 + $0x30] sm:$0xff]
        %v367 = vld [vmem:[#allocation5 + $0x38] sm:$0xff]
        %v368 = vld [vmem:[#allocation5 + $0x40] sm:$0xff]
        %v369 = vld [vmem:[#allocation5 + $0x48] sm:$0xff]
        %v370 = vld [vmem:[#allocation5 + $0x50] sm:$0xff]
        %v371 = vld [vmem:[#allocation5 + $0x58] sm:$0xff]
        %v372 = vld [vmem:[#allocation5 + $0x60] sm:$0xff]
        %v373 = vld [vmem:[#allocation5 + $0x68] sm:$0xff]
        %v374 = vld [vmem:[#allocation5 + $0x70] sm:$0xff]
        %v375 = vld [vmem:[#allocation5 + $0x78] sm:$0xff]
        %v376 = vld [vmem:[%s2] sm:$0x3]
        %v377 = vpack.c.bf16 %v345, %v344
        %v378 = vpack.c.bf16 %v347, %v346
        %v379 = vpack.c.bf16 %v349, %v348
        %v380 = vpack.c.bf16 %v351, %v350
        %v381 = vpack.c.bf16 %v353, %v352
        %v382 = vpack.c.bf16 %v355, %v354
        %v383 = vpack.c.bf16 %v357, %v356
        %v384 = vpack.c.bf16 %v359, %v358
        %v386 = vlaneseq
        %v387 = vshrl.u32 %v386, 7
        %v388 = vsub.s32 0, %v387
        %v389 = vrot.slane %v376, %v388
        %v390 = vlaneseq
        %v391 = vshrl.u32 %v390, 7
        %v392 = vsub.s32 1, %v391
        %v393 = vrot.slane %v376, %v392
        %v412 = vunpack.c.l.b16 %v360
        %v413 = vunpack.c.h.b16 %v360
        %v414 = vunpack.c.l.b16 %v361
        %v415 = vunpack.c.h.b16 %v361
        %v416 = vunpack.c.l.b16 %v362
        %v417 = vunpack.c.h.b16 %v362
        %v418 = vunpack.c.l.b16 %v363
        %v419 = vunpack.c.h.b16 %v363
        %v420 = vunpack.c.l.b16 %v364
        %v421 = vunpack.c.h.b16 %v364
        %v422 = vunpack.c.l.b16 %v365
        %v423 = vunpack.c.h.b16 %v365
        %v424 = vunpack.c.l.b16 %v366
        %v425 = vunpack.c.h.b16 %v366
        %v426 = vunpack.c.l.b16 %v367
        %v427 = vunpack.c.h.b16 %v367
        %v428 = vunpack.c.l.b16 %v368
        %v429 = vunpack.c.h.b16 %v368
        %v430 = vunpack.c.l.b16 %v369
        %v431 = vunpack.c.h.b16 %v369
        %v432 = vunpack.c.l.b16 %v370
        %v433 = vunpack.c.h.b16 %v370
        %v434 = vunpack.c.l.b16 %v371
        %v435 = vunpack.c.h.b16 %v371
        %v436 = vunpack.c.l.b16 %v372
        %v437 = vunpack.c.h.b16 %v372
        %v438 = vunpack.c.l.b16 %v373
        %v439 = vunpack.c.h.b16 %v373
        %v440 = vunpack.c.l.b16 %v374
        %v441 = vunpack.c.h.b16 %v374
        %v442 = vunpack.c.l.b16 %v375
        %v443 = vunpack.c.h.b16 %v375
        %v444 = vpack.c.b16 %v414, %v412
        %v445 = vpack.c.b16 %v415, %v413
        %v446 = vpack.c.b16 %v418, %v416
        %v447 = vpack.c.b16 %v419, %v417
        %v448 = vpack.c.b16 %v422, %v420
        %v449 = vpack.c.b16 %v423, %v421
        %v450 = vpack.c.b16 %v426, %v424
        %v451 = vpack.c.b16 %v427, %v425
        %v452 = vpack.c.b16 %v430, %v428
        %v453 = vpack.c.b16 %v431, %v429
        %v454 = vpack.c.b16 %v434, %v432
        %v455 = vpack.c.b16 %v435, %v433
        %v456 = vpack.c.b16 %v438, %v436
        %v457 = vpack.c.b16 %v439, %v437
        %v458 = vpack.c.b16 %v442, %v440
        %v459 = vpack.c.b16 %v443, %v441
        %476 = vmatprep.subr.bf16.mxu0 %v445
        %477 = vmatpush1.bf16.msra.mxu0 %v444
        %478 = vmatprep.subr.bf16.mxu0 %v447
        %479 = vmatpush1.bf16.msra.mxu0 %v446
        %480 = vmatprep.subr.bf16.mxu0 %v449
        %481 = vmatpush1.bf16.msra.mxu0 %v448
        %482 = vmatprep.subr.bf16.mxu0 %v451
        %483 = vmatpush1.bf16.msra.mxu0 %v450
        %484 = vmatprep.subr.bf16.mxu0 %v453
        %485 = vmatpush1.bf16.msra.mxu0 %v452
        %486 = vmatprep.subr.bf16.mxu0 %v455
        %487 = vmatpush1.bf16.msra.mxu0 %v454
        %488 = vmatprep.subr.bf16.mxu0 %v457
        %489 = vmatpush1.bf16.msra.mxu0 %v456
        %490 = vmatprep.subr.bf16.mxu0 %v459
        %491 = vmatpush1.bf16.msra.mxu0 %v458
        %492 = vmatprep.subr.bf16.mxu0 0
        %493 = vmatpush1.bf16.msra.mxu0 0
        %494 = vmatprep.subr.bf16.mxu0 0
        %495 = vmatpush1.bf16.msra.mxu0 0
        %496 = vmatprep.subr.bf16.mxu0 0
        %497 = vmatpush1.bf16.msra.mxu0 0
        %498 = vmatprep.subr.bf16.mxu0 0
        %499 = vmatpush1.bf16.msra.mxu0 0
        %500 = vmatprep.subr.bf16.mxu0 0
        %501 = vmatpush1.bf16.msra.mxu0 0
        %502 = vmatprep.subr.bf16.mxu0 0
        %503 = vmatpush1.bf16.msra.mxu0 0
        %504 = vmatprep.subr.bf16.mxu0 0
        %505 = vmatpush1.bf16.msra.mxu0 0
        %506 = vmatprep.subr.bf16.mxu0 0
        %507 = vmatpush1.bf16.msra.mxu0 0
        %508 = vmatprep.mubr.bf16.mxu0 0
        %509 = vmatmul.mubr.bf16.gmra.mrb[0].mxu0 %v377
        %v510 = vpop.f32.mrb[0].mxu0
        %v511 = vadd.f32 %v389, %v510
        %v512 = vpop.f32.mrb[0].mxu0
        %v513 = vadd.f32 %v393, %v512
        %v514 = vpop.f32.mrb[0].mxu0
        %v515 = vadd.f32 %v389, %v514
        %v516 = vpop.f32.mrb[0].mxu0
        %v517 = vadd.f32 %v393, %v516
        %518 = vmatprep.mubr.bf16.mxu0 0
        %519 = vmatmul.mubr.bf16.gmra.mrb[0].mxu0 %v378
        %v520 = vpop.f32.mrb[0].mxu0
        %v521 = vadd.f32 %v389, %v520
        %v522 = vpop.f32.mrb[0].mxu0
        %v523 = vadd.f32 %v393, %v522
        %v524 = vpop.f32.mrb[0].mxu0
        %v525 = vadd.f32 %v389, %v524
        %v526 = vpop.f32.mrb[0].mxu0
        %v527 = vadd.f32 %v393, %v526
        %528 = vmatprep.mubr.bf16.mxu0 0
        %529 = vmatmul.mubr.bf16.gmra.mrb[0].mxu0 %v379
        %v530 = vpop.f32.mrb[0].mxu0
        %v531 = vadd.f32 %v389, %v530
        %v532 = vpop.f32.mrb[0].mxu0
        %v533 = vadd.f32 %v393, %v532
        %v534 = vpop.f32.mrb[0].mxu0
        %v535 = vadd.f32 %v389, %v534
        %v536 = vpop.f32.mrb[0].mxu0
        %v537 = vadd.f32 %v393, %v536
        %538 = vmatprep.mubr.bf16.mxu0 0
        %539 = vmatmul.mubr.bf16.gmra.mrb[0].mxu0 %v380
        %v540 = vpop.f32.mrb[0].mxu0
        %v541 = vadd.f32 %v389, %v540
        %v542 = vpop.f32.mrb[0].mxu0
        %v543 = vadd.f32 %v393, %v542
        %v544 = vpop.f32.mrb[0].mxu0
        %v545 = vadd.f32 %v389, %v544
        %v546 = vpop.f32.mrb[0].mxu0
        %v547 = vadd.f32 %v393, %v546
        %548 = vmatprep.mubr.bf16.mxu0 0
        %549 = vmatmul.mubr.bf16.gmra.mrb[0].mxu0 %v381
        %v550 = vpop.f32.mrb[0].mxu0
        %v551 = vadd.f32 %v389, %v550
        %v552 = vpop.f32.mrb[0].mxu0
        %v553 = vadd.f32 %v393, %v552
        %v554 = vpop.f32.mrb[0].mxu0
        %v555 = vadd.f32 %v389, %v554
        %v556 = vpop.f32.mrb[0].mxu0
        %v557 = vadd.f32 %v393, %v556
        %558 = vmatprep.mubr.bf16.mxu0 0
        %559 = vmatmul.mubr.bf16.gmra.mrb[0].mxu0 %v382
        %v560 = vpop.f32.mrb[0].mxu0
        %v561 = vadd.f32 %v389, %v560
        %v562 = vpop.f32.mrb[0].mxu0
        %v563 = vadd.f32 %v393, %v562
        %v564 = vpop.f32.mrb[0].mxu0
        %v565 = vadd.f32 %v389, %v564
        %v566 = vpop.f32.mrb[0].mxu0
        %v567 = vadd.f32 %v393, %v566
        %568 = vmatprep.mubr.bf16.mxu0 0
        %569 = vmatmul.mubr.bf16.gmra.mrb[0].mxu0 %v383
        %v570 = vpop.f32.mrb[0].mxu0
        %v571 = vadd.f32 %v389, %v570
        %v572 = vpop.f32.mrb[0].mxu0
        %v573 = vadd.f32 %v393, %v572
        %v574 = vpop.f32.mrb[0].mxu0
        %v575 = vadd.f32 %v389, %v574
        %v576 = vpop.f32.mrb[0].mxu0
        %v577 = vadd.f32 %v393, %v576
        %578 = vmatprep.mubr.bf16.mxu0 0
        %579 = vmatmul.mubr.bf16.gmra.mrb[0].mxu0 %v384
        %v580 = vpop.f32.mrb[0].mxu0
        %v581 = vadd.f32 %v389, %v580
        %v582 = vpop.f32.mrb[0].mxu0
        %v583 = vadd.f32 %v393, %v582
        %v584 = vpop.f32.mrb[0].mxu0
        %v585 = vadd.f32 %v389, %v584
        %v586 = vpop.f32.mrb[0].mxu0
        %v587 = vadd.f32 %v393, %v586
        %588 = vdwg.mxu0
        %v589 = vmax.f32 %v511, 0.0
        %v590 = vmax.f32 %v513, 0.0
        %v591 = vmax.f32 %v515, 0.0
        %v592 = vmax.f32 %v517, 0.0
        %v593 = vmax.f32 %v521, 0.0
        %v594 = vmax.f32 %v523, 0.0
        %v595 = vmax.f32 %v525, 0.0
        %v596 = vmax.f32 %v527, 0.0
        %v597 = vmax.f32 %v531, 0.0
        %v598 = vmax.f32 %v533, 0.0
        %v599 = vmax.f32 %v535, 0.0
        %v600 = vmax.f32 %v537, 0.0
        %v601 = vmax.f32 %v541, 0.0
        %v602 = vmax.f32 %v543, 0.0
        %v603 = vmax.f32 %v545, 0.0
        %v604 = vmax.f32 %v547, 0.0
        %v605 = vmax.f32 %v551, 0.0
        %v606 = vmax.f32 %v553, 0.0
        %v607 = vmax.f32 %v555, 0.0
        %v608 = vmax.f32 %v557, 0.0
        %v609 = vmax.f32 %v561, 0.0
        %v610 = vmax.f32 %v563, 0.0
        %v611 = vmax.f32 %v565, 0.0
        %v612 = vmax.f32 %v567, 0.0
        %v613 = vmax.f32 %v571, 0.0
        %v614 = vmax.f32 %v573, 0.0
        %v615 = vmax.f32 %v575, 0.0
        %v616 = vmax.f32 %v577, 0.0
        %v617 = vmax.f32 %v581, 0.0
        %v618 = vmax.f32 %v583, 0.0
        %v619 = vmax.f32 %v585, 0.0
        %v620 = vmax.f32 %v587, 0.0
        %v621 = vld [vmem:[#allocation7] sm:$0xff]
        %v622 = vld [vmem:[#allocation7 + $0x8] sm:$0xff]
        %v623 = vld [vmem:[#allocation7 + $0x10] sm:$0xff]
        %v624 = vld [vmem:[#allocation7 + $0x18] sm:$0xff]
        %v625 = vld [vmem:[#allocation7 + $0x20] sm:$0xff]
        %v626 = vld [vmem:[#allocation7 + $0x28] sm:$0xff]
        %v627 = vld [vmem:[#allocation7 + $0x30] sm:$0xff]
        %v628 = vld [vmem:[#allocation7 + $0x38] sm:$0xff]
        %v629 = vld [vmem:[#allocation7 + $0x40] sm:$0xff]
        %v630 = vld [vmem:[#allocation7 + $0x48] sm:$0xff]
        %v631 = vld [vmem:[#allocation7 + $0x50] sm:$0xff]
        %v632 = vld [vmem:[#allocation7 + $0x58] sm:$0xff]
        %v633 = vld [vmem:[#allocation7 + $0x60] sm:$0xff]
        %v634 = vld [vmem:[#allocation7 + $0x68] sm:$0xff]
        %v635 = vld [vmem:[#allocation7 + $0x70] sm:$0xff]
        %v636 = vld [vmem:[#allocation7 + $0x78] sm:$0xff]
        %v637 = vld [vmem:[#allocation7 + $0x80] sm:$0xff]
        %v638 = vld [vmem:[#allocation7 + $0x88] sm:$0xff]
        %v639 = vld [vmem:[#allocation7 + $0x90] sm:$0xff]
        %v640 = vld [vmem:[#allocation7 + $0x98] sm:$0xff]
        %v641 = vld [vmem:[#allocation7 + $0xa0] sm:$0xff]
        %v642 = vld [vmem:[#allocation7 + $0xa8] sm:$0xff]
        %v643 = vld [vmem:[#allocation7 + $0xb0] sm:$0xff]
        %v644 = vld [vmem:[#allocation7 + $0xb8] sm:$0xff]
        %v645 = vld [vmem:[#allocation7 + $0xc0] sm:$0xff]
        %v646 = vld [vmem:[#allocation7 + $0xc8] sm:$0xff]
        %v647 = vld [vmem:[#allocation7 + $0xd0] sm:$0xff]
        %v648 = vld [vmem:[#allocation7 + $0xd8] sm:$0xff]
        %v649 = vld [vmem:[#allocation7 + $0xe0] sm:$0xff]
        %v650 = vld [vmem:[#allocation7 + $0xe8] sm:$0xff]
        %v651 = vld [vmem:[#allocation7 + $0xf0] sm:$0xff]
        %v652 = vld [vmem:[#allocation7 + $0xf8] sm:$0xff]
        %v653 = vld [vmem:[%s4] sm:$0x3]
        %v654 = vpack.c.bf16 %v591, %v589
        %v655 = vpack.c.bf16 %v592, %v590
        %v656 = vpack.c.bf16 %v595, %v593
        %v657 = vpack.c.bf16 %v596, %v594
        %v658 = vpack.c.bf16 %v599, %v597
        %v659 = vpack.c.bf16 %v600, %v598
        %v660 = vpack.c.bf16 %v603, %v601
        %v661 = vpack.c.bf16 %v604, %v602
        %v662 = vpack.c.bf16 %v607, %v605
        %v663 = vpack.c.bf16 %v608, %v606
        %v664 = vpack.c.bf16 %v611, %v609
        %v665 = vpack.c.bf16 %v612, %v610
        %v666 = vpack.c.bf16 %v615, %v613
        %v667 = vpack.c.bf16 %v616, %v614
        %v668 = vpack.c.bf16 %v619, %v617
        %v669 = vpack.c.bf16 %v620, %v618
        %v671 = vlaneseq
        %v672 = vshrl.u32 %v671, 7
        %v673 = vsub.s32 0, %v672
        %v674 = vrot.slane %v653, %v673
        %v675 = vlaneseq
        %v676 = vshrl.u32 %v675, 7
        %v677 = vsub.s32 1, %v676
        %v678 = vrot.slane %v653, %v677
        %v713 = vunpack.c.l.b16 %v621
        %v714 = vunpack.c.h.b16 %v621
        %v715 = vunpack.c.l.b16 %v622
        %v716 = vunpack.c.h.b16 %v622
        %v717 = vunpack.c.l.b16 %v623
        %v718 = vunpack.c.h.b16 %v623
        %v719 = vunpack.c.l.b16 %v624
        %v720 = vunpack.c.h.b16 %v624
        %v721 = vunpack.c.l.b16 %v625
        %v722 = vunpack.c.h.b16 %v625
        %v723 = vunpack.c.l.b16 %v626
        %v724 = vunpack.c.h.b16 %v626
        %v725 = vunpack.c.l.b16 %v627
        %v726 = vunpack.c.h.b16 %v627
        %v727 = vunpack.c.l.b16 %v628
        %v728 = vunpack.c.h.b16 %v628
        %v729 = vunpack.c.l.b16 %v629
        %v730 = vunpack.c.h.b16 %v629
        %v731 = vunpack.c.l.b16 %v630
        %v732 = vunpack.c.h.b16 %v630
        %v733 = vunpack.c.l.b16 %v631
        %v734 = vunpack.c.h.b16 %v631
        %v735 = vunpack.c.l.b16 %v632
        %v736 = vunpack.c.h.b16 %v632
        %v737 = vunpack.c.l.b16 %v633
        %v738 = vunpack.c.h.b16 %v633
        %v739 = vunpack.c.l.b16 %v634
        %v740 = vunpack.c.h.b16 %v634
        %v741 = vunpack.c.l.b16 %v635
        %v742 = vunpack.c.h.b16 %v635
        %v743 = vunpack.c.l.b16 %v636
        %v744 = vunpack.c.h.b16 %v636
        %v745 = vunpack.c.l.b16 %v637
        %v746 = vunpack.c.h.b16 %v637
        %v747 = vunpack.c.l.b16 %v638
        %v748 = vunpack.c.h.b16 %v638
        %v749 = vunpack.c.l.b16 %v639
        %v750 = vunpack.c.h.b16 %v639
        %v751 = vunpack.c.l.b16 %v640
        %v752 = vunpack.c.h.b16 %v640
        %v753 = vunpack.c.l.b16 %v641
        %v754 = vunpack.c.h.b16 %v641
        %v755 = vunpack.c.l.b16 %v642
        %v756 = vunpack.c.h.b16 %v642
        %v757 = vunpack.c.l.b16 %v643
        %v758 = vunpack.c.h.b16 %v643
        %v759 = vunpack.c.l.b16 %v644
        %v760 = vunpack.c.h.b16 %v644
        %v761 = vunpack.c.l.b16 %v645
        %v762 = vunpack.c.h.b16 %v645
        %v763 = vunpack.c.l.b16 %v646
        %v764 = vunpack.c.h.b16 %v646
        %v765 = vunpack.c.l.b16 %v647
        %v766 = vunpack.c.h.b16 %v647
        %v767 = vunpack.c.l.b16 %v648
        %v768 = vunpack.c.h.b16 %v648
        %v769 = vunpack.c.l.b16 %v649
        %v770 = vunpack.c.h.b16 %v649
        %v771 = vunpack.c.l.b16 %v650
        %v772 = vunpack.c.h.b16 %v650
        %v773 = vunpack.c.l.b16 %v651
        %v774 = vunpack.c.h.b16 %v651
        %v775 = vunpack.c.l.b16 %v652
        %v776 = vunpack.c.h.b16 %v652
        %v777 = vpack.c.b16 %v715, %v713
        %v778 = vpack.c.b16 %v716, %v714
        %v779 = vpack.c.b16 %v719, %v717
        %v780 = vpack.c.b16 %v720, %v718
        %v781 = vpack.c.b16 %v723, %v721
        %v782 = vpack.c.b16 %v724, %v722
        %v783 = vpack.c.b16 %v727, %v725
        %v784 = vpack.c.b16 %v728, %v726
        %v785 = vpack.c.b16 %v731, %v729
        %v786 = vpack.c.b16 %v732, %v730
        %v787 = vpack.c.b16 %v735, %v733
        %v788 = vpack.c.b16 %v736, %v734
        %v789 = vpack.c.b16 %v739, %v737
        %v790 = vpack.c.b16 %v740, %v738
        %v791 = vpack.c.b16 %v743, %v741
        %v792 = vpack.c.b16 %v744, %v742
        %v793 = vpack.c.b16 %v747, %v745
        %v794 = vpack.c.b16 %v748, %v746
        %v795 = vpack.c.b16 %v751, %v749
        %v796 = vpack.c.b16 %v752, %v750
        %v797 = vpack.c.b16 %v755, %v753
        %v798 = vpack.c.b16 %v756, %v754
        %v799 = vpack.c.b16 %v759, %v757
        %v800 = vpack.c.b16 %v760, %v758
        %v801 = vpack.c.b16 %v763, %v761
        %v802 = vpack.c.b16 %v764, %v762
        %v803 = vpack.c.b16 %v767, %v765
        %v804 = vpack.c.b16 %v768, %v766
        %v805 = vpack.c.b16 %v771, %v769
        %v806 = vpack.c.b16 %v772, %v770
        %v807 = vpack.c.b16 %v775, %v773
        %v808 = vpack.c.b16 %v776, %v774
        %841 = vmatprep.subr.bf16.mxu0 %v778
        %842 = vmatpush1.bf16.msra.mxu0 %v777
        %843 = vmatprep.subr.bf16.mxu0 %v780
        %844 = vmatpush1.bf16.msra.mxu0 %v779
        %845 = vmatprep.subr.bf16.mxu0 %v782
        %846 = vmatpush1.bf16.msra.mxu0 %v781
        %847 = vmatprep.subr.bf16.mxu0 %v784
        %848 = vmatpush1.bf16.msra.mxu0 %v783
        %849 = vmatprep.subr.bf16.mxu0 %v786
        %850 = vmatpush1.bf16.msra.mxu0 %v785
        %851 = vmatprep.subr.bf16.mxu0 %v788
        %852 = vmatpush1.bf16.msra.mxu0 %v787
        %853 = vmatprep.subr.bf16.mxu0 %v790
        %854 = vmatpush1.bf16.msra.mxu0 %v789
        %855 = vmatprep.subr.bf16.mxu0 %v792
        %856 = vmatpush1.bf16.msra.mxu0 %v791
        %857 = vmatprep.subr.bf16.mxu0 %v794
        %858 = vmatpush1.bf16.msra.mxu0 %v793
        %859 = vmatprep.subr.bf16.mxu0 %v796
        %860 = vmatpush1.bf16.msra.mxu0 %v795
        %861 = vmatprep.subr.bf16.mxu0 %v798
        %862 = vmatpush1.bf16.msra.mxu0 %v797
        %863 = vmatprep.subr.bf16.mxu0 %v800
        %864 = vmatpush1.bf16.msra.mxu0 %v799
        %865 = vmatprep.subr.bf16.mxu0 %v802
        %866 = vmatpush1.bf16.msra.mxu0 %v801
        %867 = vmatprep.subr.bf16.mxu0 %v804
        %868 = vmatpush1.bf16.msra.mxu0 %v803
        %869 = vmatprep.subr.bf16.mxu0 %v806
        %870 = vmatpush1.bf16.msra.mxu0 %v805
        %871 = vmatprep.subr.bf16.mxu0 %v808
        %872 = vmatpush1.bf16.msra.mxu0 %v807
        %873 = vmatprep.mubr.bf16.mxu0 %v655
        %874 = vmatmul.mubr.bf16.gmra.mrb[0].mxu0 %v654
        %v875 = vpop.f32.mrb[0].mxu0
        %v876 = vadd.f32 %v674, %v875
        %v877 = vpop.f32.mrb[0].mxu0
        %v878 = vadd.f32 %v678, %v877
        %v879 = vpop.f32.mrb[0].mxu0
        %v880 = vadd.f32 %v674, %v879
        %v881 = vpop.f32.mrb[0].mxu0
        %v882 = vadd.f32 %v678, %v881
        %883 = vmatprep.mubr.bf16.mxu0 %v657
        %884 = vmatmul.mubr.bf16.gmra.mrb[0].mxu0 %v656
        %v885 = vpop.f32.mrb[0].mxu0
        %v886 = vadd.f32 %v674, %v885
        %v887 = vpop.f32.mrb[0].mxu0
        %v888 = vadd.f32 %v678, %v887
        %v889 = vpop.f32.mrb[0].mxu0
        %v890 = vadd.f32 %v674, %v889
        %v891 = vpop.f32.mrb[0].mxu0
        %v892 = vadd.f32 %v678, %v891
        %893 = vmatprep.mubr.bf16.mxu0 %v659
        %894 = vmatmul.mubr.bf16.gmra.mrb[0].mxu0 %v658
        %v895 = vpop.f32.mrb[0].mxu0
        %v896 = vadd.f32 %v674, %v895
        %v897 = vpop.f32.mrb[0].mxu0
        %v898 = vadd.f32 %v678, %v897
        %v899 = vpop.f32.mrb[0].mxu0
        %v900 = vadd.f32 %v674, %v899
        %v901 = vpop.f32.mrb[0].mxu0
        %v902 = vadd.f32 %v678, %v901
        %903 = vmatprep.mubr.bf16.mxu0 %v661
        %904 = vmatmul.mubr.bf16.gmra.mrb[0].mxu0 %v660
        %v905 = vpop.f32.mrb[0].mxu0
        %v906 = vadd.f32 %v674, %v905
        %v907 = vpop.f32.mrb[0].mxu0
        %v908 = vadd.f32 %v678, %v907
        %v909 = vpop.f32.mrb[0].mxu0
        %v910 = vadd.f32 %v674, %v909
        %v911 = vpop.f32.mrb[0].mxu0
        %v912 = vadd.f32 %v678, %v911
        %913 = vmatprep.mubr.bf16.mxu0 %v663
        %914 = vmatmul.mubr.bf16.gmra.mrb[0].mxu0 %v662
        %v915 = vpop.f32.mrb[0].mxu0
        %v916 = vadd.f32 %v674, %v915
        %v917 = vpop.f32.mrb[0].mxu0
        %v918 = vadd.f32 %v678, %v917
        %v919 = vpop.f32.mrb[0].mxu0
        %v920 = vadd.f32 %v674, %v919
        %v921 = vpop.f32.mrb[0].mxu0
        %v922 = vadd.f32 %v678, %v921
        %923 = vmatprep.mubr.bf16.mxu0 %v665
        %924 = vmatmul.mubr.bf16.gmra.mrb[0].mxu0 %v664
        %v925 = vpop.f32.mrb[0].mxu0
        %v926 = vadd.f32 %v674, %v925
        %v927 = vpop.f32.mrb[0].mxu0
        %v928 = vadd.f32 %v678, %v927
        %v929 = vpop.f32.mrb[0].mxu0
        %v930 = vadd.f32 %v674, %v929
        %v931 = vpop.f32.mrb[0].mxu0
        %v932 = vadd.f32 %v678, %v931
        %933 = vmatprep.mubr.bf16.mxu0 %v667
        %934 = vmatmul.mubr.bf16.gmra.mrb[0].mxu0 %v666
        %v935 = vpop.f32.mrb[0].mxu0
        %v936 = vadd.f32 %v674, %v935
        %v937 = vpop.f32.mrb[0].mxu0
        %v938 = vadd.f32 %v678, %v937
        %v939 = vpop.f32.mrb[0].mxu0
        %v940 = vadd.f32 %v674, %v939
        %v941 = vpop.f32.mrb[0].mxu0
        %v942 = vadd.f32 %v678, %v941
        %943 = vmatprep.mubr.bf16.mxu0 %v669
        %944 = vmatmul.mubr.bf16.gmra.mrb[0].mxu0 %v668
        %v945 = vpop.f32.mrb[0].mxu0
        %v946 = vadd.f32 %v674, %v945
        %v947 = vpop.f32.mrb[0].mxu0
        %v948 = vadd.f32 %v678, %v947
        %v949 = vpop.f32.mrb[0].mxu0
        %v950 = vadd.f32 %v674, %v949
        %v951 = vpop.f32.mrb[0].mxu0
        %v952 = vadd.f32 %v678, %v951
        %953 = vdwg.mxu0
        %v954 = vmax.f32 %v876, 0.0
        %v955 = vmax.f32 %v878, 0.0
        %v956 = vmax.f32 %v880, 0.0
        %v957 = vmax.f32 %v882, 0.0
        %v958 = vmax.f32 %v886, 0.0
        %v959 = vmax.f32 %v888, 0.0
        %v960 = vmax.f32 %v890, 0.0
        %v961 = vmax.f32 %v892, 0.0
        %v962 = vmax.f32 %v896, 0.0
        %v963 = vmax.f32 %v898, 0.0
        %v964 = vmax.f32 %v900, 0.0
        %v965 = vmax.f32 %v902, 0.0
        %v966 = vmax.f32 %v906, 0.0
        %v967 = vmax.f32 %v908, 0.0
        %v968 = vmax.f32 %v910, 0.0
        %v969 = vmax.f32 %v912, 0.0
        %v970 = vmax.f32 %v916, 0.0
        %v971 = vmax.f32 %v918, 0.0
        %v972 = vmax.f32 %v920, 0.0
        %v973 = vmax.f32 %v922, 0.0
        %v974 = vmax.f32 %v926, 0.0
        %v975 = vmax.f32 %v928, 0.0
        %v976 = vmax.f32 %v930, 0.0
        %v977 = vmax.f32 %v932, 0.0
        %v978 = vmax.f32 %v936, 0.0
        %v979 = vmax.f32 %v938, 0.0
        %v980 = vmax.f32 %v940, 0.0
        %v981 = vmax.f32 %v942, 0.0
        %v982 = vmax.f32 %v946, 0.0
        %v983 = vmax.f32 %v948, 0.0
        %v984 = vmax.f32 %v950, 0.0
        %v985 = vmax.f32 %v952, 0.0
        %v986 = vld [vmem:[#allocation8] sm:$0xf]
        %v987 = vld [vmem:[#allocation8 + $0x4] sm:$0xf]
        %v988 = vld [vmem:[#allocation8 + $0x8] sm:$0xf]
        %v989 = vld [vmem:[#allocation8 + $0xc] sm:$0xf]
        %v990 = vld [vmem:[#allocation8 + $0x10] sm:$0xf]
        %v991 = vld [vmem:[#allocation8 + $0x14] sm:$0xf]
        %v992 = vld [vmem:[#allocation8 + $0x18] sm:$0xf]
        %v993 = vld [vmem:[#allocation8 + $0x1c] sm:$0xf]
        %v994 = vld [vmem:[#allocation8 + $0x20] sm:$0xf]
        %v995 = vld [vmem:[#allocation8 + $0x24] sm:$0xf]
        %v996 = vld [vmem:[#allocation8 + $0x28] sm:$0xf]
        %v997 = vld [vmem:[#allocation8 + $0x2c] sm:$0xf]
        %v998 = vld [vmem:[#allocation8 + $0x30] sm:$0xf]
        %v999 = vld [vmem:[#allocation8 + $0x34] sm:$0xf]
        %v1000 = vld [vmem:[#allocation8 + $0x38] sm:$0xf]
        %v1001 = vld [vmem:[#allocation8 + $0x3c] sm:$0xf]
        %v1002 = vld [vmem:[#allocation8 + $0x40] sm:$0xf]
        %v1003 = vld [vmem:[#allocation8 + $0x44] sm:$0xf]
        %v1004 = vld [vmem:[#allocation8 + $0x48] sm:$0xf]
        %v1005 = vld [vmem:[#allocation8 + $0x4c] sm:$0xf]
        %v1006 = vld [vmem:[#allocation8 + $0x50] sm:$0xf]
        %v1007 = vld [vmem:[#allocation8 + $0x54] sm:$0xf]
        %v1008 = vld [vmem:[#allocation8 + $0x58] sm:$0xf]
        %v1009 = vld [vmem:[#allocation8 + $0x5c] sm:$0xf]
        %v1010 = vld [vmem:[#allocation8 + $0x60] sm:$0xf]
        %v1011 = vld [vmem:[#allocation8 + $0x64] sm:$0xf]
        %v1012 = vld [vmem:[#allocation8 + $0x68] sm:$0xf]
        %v1013 = vld [vmem:[#allocation8 + $0x6c] sm:$0xf]
        %v1014 = vld [vmem:[#allocation8 + $0x70] sm:$0xf]
        %v1015 = vld [vmem:[#allocation8 + $0x74] sm:$0xf]
        %v1016 = vld [vmem:[#allocation8 + $0x78] sm:$0xf]
        %v1017 = vld [vmem:[#allocation8 + $0x7c] sm:$0xf]
        %v1018 = vld [vmem:[%s6] sm:$0x1]
        %v1019 = vpack.c.bf16 %v956, %v954
        %v1020 = vpack.c.bf16 %v957, %v955
        %v1021 = vpack.c.bf16 %v960, %v958
        %v1022 = vpack.c.bf16 %v961, %v959
        %v1023 = vpack.c.bf16 %v964, %v962
        %v1024 = vpack.c.bf16 %v965, %v963
        %v1025 = vpack.c.bf16 %v968, %v966
        %v1026 = vpack.c.bf16 %v969, %v967
        %v1027 = vpack.c.bf16 %v972, %v970
        %v1028 = vpack.c.bf16 %v973, %v971
        %v1029 = vpack.c.bf16 %v976, %v974
        %v1030 = vpack.c.bf16 %v977, %v975
        %v1031 = vpack.c.bf16 %v980, %v978
        %v1032 = vpack.c.bf16 %v981, %v979
        %v1033 = vpack.c.bf16 %v984, %v982
        %v1034 = vpack.c.bf16 %v985, %v983
        %v1036 = vlaneseq
        %v1037 = vshrl.u32 %v1036, 7
        %v1038 = vsub.s32 0, %v1037
        %v1039 = vrot.slane %v1018, %v1038
        %v1073 = vunpack.c.l.b16 %v986
        %v1074 = vunpack.c.l.b16 %v987
        %v1075 = vunpack.c.l.b16 %v988
        %v1076 = vunpack.c.l.b16 %v989
        %v1077 = vunpack.c.l.b16 %v990
        %v1078 = vunpack.c.l.b16 %v991
        %v1079 = vunpack.c.l.b16 %v992
        %v1080 = vunpack.c.l.b16 %v993
        %v1081 = vunpack.c.l.b16 %v994
        %v1082 = vunpack.c.l.b16 %v995
        %v1083 = vunpack.c.l.b16 %v996
        %v1084 = vunpack.c.l.b16 %v997
        %v1085 = vunpack.c.l.b16 %v998
        %v1086 = vunpack.c.l.b16 %v999
        %v1087 = vunpack.c.l.b16 %v1000
        %v1088 = vunpack.c.l.b16 %v1001
        %v1089 = vunpack.c.l.b16 %v1002
        %v1090 = vunpack.c.l.b16 %v1003
        %v1091 = vunpack.c.l.b16 %v1004
        %v1092 = vunpack.c.l.b16 %v1005
        %v1093 = vunpack.c.l.b16 %v1006
        %v1094 = vunpack.c.l.b16 %v1007
        %v1095 = vunpack.c.l.b16 %v1008
        %v1096 = vunpack.c.l.b16 %v1009
        %v1097 = vunpack.c.l.b16 %v1010
        %v1098 = vunpack.c.l.b16 %v1011
        %v1099 = vunpack.c.l.b16 %v1012
        %v1100 = vunpack.c.l.b16 %v1013
        %v1101 = vunpack.c.l.b16 %v1014
        %v1102 = vunpack.c.l.b16 %v1015
        %v1103 = vunpack.c.l.b16 %v1016
        %v1104 = vunpack.c.l.b16 %v1017
        %v1105 = vpack.c.b16 %v1074, %v1073
        %v1106 = vpack.c.b16 %v1076, %v1075
        %v1107 = vpack.c.b16 %v1078, %v1077
        %v1108 = vpack.c.b16 %v1080, %v1079
        %v1109 = vpack.c.b16 %v1082, %v1081
        %v1110 = vpack.c.b16 %v1084, %v1083
        %v1111 = vpack.c.b16 %v1086, %v1085
        %v1112 = vpack.c.b16 %v1088, %v1087
        %v1113 = vpack.c.b16 %v1090, %v1089
        %v1114 = vpack.c.b16 %v1092, %v1091
        %v1115 = vpack.c.b16 %v1094, %v1093
        %v1116 = vpack.c.b16 %v1096, %v1095
        %v1117 = vpack.c.b16 %v1098, %v1097
        %v1118 = vpack.c.b16 %v1100, %v1099
        %v1119 = vpack.c.b16 %v1102, %v1101
        %v1120 = vpack.c.b16 %v1104, %v1103
        %1137 = vmatprep.subr.bf16.mxu0 0
        %1138 = vmatpush1.bf16.msra.mxu0 %v1105
        %1139 = vmatprep.subr.bf16.mxu0 0
        %1140 = vmatpush1.bf16.msra.mxu0 %v1106
        %1141 = vmatprep.subr.bf16.mxu0 0
        %1142 = vmatpush1.bf16.msra.mxu0 %v1107
        %1143 = vmatprep.subr.bf16.mxu0 0
        %1144 = vmatpush1.bf16.msra.mxu0 %v1108
        %1145 = vmatprep.subr.bf16.mxu0 0
        %1146 = vmatpush1.bf16.msra.mxu0 %v1109
        %1147 = vmatprep.subr.bf16.mxu0 0
        %1148 = vmatpush1.bf16.msra.mxu0 %v1110
        %1149 = vmatprep.subr.bf16.mxu0 0
        %1150 = vmatpush1.bf16.msra.mxu0 %v1111
        %1151 = vmatprep.subr.bf16.mxu0 0
        %1152 = vmatpush1.bf16.msra.mxu0 %v1112
        %1153 = vmatprep.subr.bf16.mxu0 0
        %1154 = vmatpush1.bf16.msra.mxu0 %v1113
        %1155 = vmatprep.subr.bf16.mxu0 0
        %1156 = vmatpush1.bf16.msra.mxu0 %v1114
        %1157 = vmatprep.subr.bf16.mxu0 0
        %1158 = vmatpush1.bf16.msra.mxu0 %v1115
        %1159 = vmatprep.subr.bf16.mxu0 0
        %1160 = vmatpush1.bf16.msra.mxu0 %v1116
        %1161 = vmatprep.subr.bf16.mxu0 0
        %1162 = vmatpush1.bf16.msra.mxu0 %v1117
        %1163 = vmatprep.subr.bf16.mxu0 0
        %1164 = vmatpush1.bf16.msra.mxu0 %v1118
        %1165 = vmatprep.subr.bf16.mxu0 0
        %1166 = vmatpush1.bf16.msra.mxu0 %v1119
        %1167 = vmatprep.subr.bf16.mxu0 0
        %1168 = vmatpush1.bf16.msra.mxu0 %v1120
        %1169 = vmatprep.mubr.bf16.mxu0 %v1020
        %1170 = vmatmul.mubr.bf16.gmra.mrb[0].mxu0 %v1019
        %v1171 = vpop.f32.mrb[0].mxu0
        %v1172 = vadd.f32 %v1039, %v1171
        %v1173 = vpop.f32.mrb[0].mxu0
        %v1174 = vpop.f32.mrb[0].mxu0
        %v1175 = vadd.f32 %v1039, %v1174
        %v1176 = vpop.f32.mrb[0].mxu0
        %1177 = vmatprep.mubr.bf16.mxu0 %v1022
        %1178 = vmatmul.mubr.bf16.gmra.mrb[0].mxu0 %v1021
        %v1179 = vpop.f32.mrb[0].mxu0
        %v1180 = vadd.f32 %v1039, %v1179
        %v1181 = vpop.f32.mrb[0].mxu0
        %v1182 = vpop.f32.mrb[0].mxu0
        %v1183 = vadd.f32 %v1039, %v1182
        %v1184 = vpop.f32.mrb[0].mxu0
        %1185 = vmatprep.mubr.bf16.mxu0 %v1024
        %1186 = vmatmul.mubr.bf16.gmra.mrb[0].mxu0 %v1023
        %v1187 = vpop.f32.mrb[0].mxu0
        %v1188 = vadd.f32 %v1039, %v1187
        %v1189 = vpop.f32.mrb[0].mxu0
        %v1190 = vpop.f32.mrb[0].mxu0
        %v1191 = vadd.f32 %v1039, %v1190
        %v1192 = vpop.f32.mrb[0].mxu0
        %1193 = vmatprep.mubr.bf16.mxu0 %v1026
        %1194 = vmatmul.mubr.bf16.gmra.mrb[0].mxu0 %v1025
        %v1195 = vpop.f32.mrb[0].mxu0
        %v1196 = vadd.f32 %v1039, %v1195
        %v1197 = vpop.f32.mrb[0].mxu0
        %v1198 = vpop.f32.mrb[0].mxu0
        %v1199 = vadd.f32 %v1039, %v1198
        %v1200 = vpop.f32.mrb[0].mxu0
        %1201 = vmatprep.mubr.bf16.mxu0 %v1028
        %1202 = vmatmul.mubr.bf16.gmra.mrb[0].mxu0 %v1027
        %v1203 = vpop.f32.mrb[0].mxu0
        %v1204 = vadd.f32 %v1039, %v1203
        %v1205 = vpop.f32.mrb[0].mxu0
        %v1206 = vpop.f32.mrb[0].mxu0
        %v1207 = vadd.f32 %v1039, %v1206
        %v1208 = vpop.f32.mrb[0].mxu0
        %1209 = vmatprep.mubr.bf16.mxu0 %v1030
        %1210 = vmatmul.mubr.bf16.gmra.mrb[0].mxu0 %v1029
        %v1211 = vpop.f32.mrb[0].mxu0
        %v1212 = vadd.f32 %v1039, %v1211
        %v1213 = vpop.f32.mrb[0].mxu0
        %v1214 = vpop.f32.mrb[0].mxu0
        %v1215 = vadd.f32 %v1039, %v1214
        %v1216 = vpop.f32.mrb[0].mxu0
        %1217 = vmatprep.mubr.bf16.mxu0 %v1032
        %1218 = vmatmul.mubr.bf16.gmra.mrb[0].mxu0 %v1031
        %v1219 = vpop.f32.mrb[0].mxu0
        %v1220 = vadd.f32 %v1039, %v1219
        %v1221 = vpop.f32.mrb[0].mxu0
        %v1222 = vpop.f32.mrb[0].mxu0
        %v1223 = vadd.f32 %v1039, %v1222
        %v1224 = vpop.f32.mrb[0].mxu0
        %1225 = vmatprep.mubr.bf16.mxu0 %v1034
        %1226 = vmatmul.mubr.bf16.gmra.mrb[0].mxu0 %v1033
        %v1227 = vpop.f32.mrb[0].mxu0
        %v1228 = vadd.f32 %v1039, %v1227
        %v1229 = vpop.f32.mrb[0].mxu0
        %v1230 = vpop.f32.mrb[0].mxu0
        %v1231 = vadd.f32 %v1039, %v1230
        %v1232 = vpop.f32.mrb[0].mxu0
        %1233 = vdwg.mxu0
        %1234 = vst [vmem:[%s340] sm:$0xff] %v1172
        %1235 = vst [vmem:[%s340 + $0x8] sm:$0xff] %v1175
        %1236 = vst [vmem:[%s340 + $0x10] sm:$0xff] %v1180
        %1237 = vst [vmem:[%s340 + $0x18] sm:$0xff] %v1183
        %1238 = vst [vmem:[%s340 + $0x20] sm:$0xff] %v1188
        %1239 = vst [vmem:[%s340 + $0x28] sm:$0xff] %v1191
        %1240 = vst [vmem:[%s340 + $0x30] sm:$0xff] %v1196
        %1241 = vst [vmem:[%s340 + $0x38] sm:$0xff] %v1199
        %1242 = vst [vmem:[%s340 + $0x40] sm:$0xff] %v1204
        %1243 = vst [vmem:[%s340 + $0x48] sm:$0xff] %v1207
        %1244 = vst [vmem:[%s340 + $0x50] sm:$0xff] %v1212
        %1245 = vst [vmem:[%s340 + $0x58] sm:$0xff] %v1215
        %1246 = vst [vmem:[%s340 + $0x60] sm:$0xff] %v1220
        %1247 = vst [vmem:[%s340 + $0x68] sm:$0xff] %v1223
        %1248 = vst [vmem:[%s340 + $0x70] sm:$0xff] %v1228
        %1249 = vst [vmem:[%s340 + $0x78] sm:$0xff] %v1231
        %s1250 = sand.u32 %s186, 1
        %s1251 = scalar_lea.sflag [#allocation4], %s1250
        %s1252 = sand.u32 %s186, 1
        %s1253 = smul.addr %s1252, 128
        %s1254 = scalar_lea.vmem [#allocation10], %s1253
        // Predicated region
        $region65: #{tpu_custom_call.1} parent=47 // pred_check
          %p1255 = pneg %p196
        $region66: #{tpu_custom_call.1} parent=47 // pred_check_branch
          %1257 = sbr.rel (%p1255) target = $region68
        $region67: #{tpu_custom_call.1} parent=47 // pred_region
          %s1258 = smul.u32 16, %s26
          %s1260 = ssub.s32 2048, 2048
          %1261 = vsyncadd %s1251, %s1260
          %s1262 = smul.addr %s1258, 128
          %s1263 = scalar_lea.hbm %s7, %s1262
          %s1264 = sshll.u32 %s1254, 4
          %s1265 = int_to_ptr.vmem [resolvable:$true] %s1264
          %1270 = dma.vmem_to_hbm [thread:$0]  %s1265, 2048, %s1263, %s1251, 128, 128, 8
        $region68: #{tpu_custom_call.1} parent=47 // pred_fallthru
          _
      $region48: #{tpu_custom_call.1} parent=5 // pred_fallthru
        _
      %p1271 = scmp.le.s32.totalorder 2, %s21
      // Predicated region
      $region69: #{tpu_custom_call.1} parent=5 // pred_check
        %p1272 = pneg %p1271
      $region70: #{tpu_custom_call.1} parent=5 // pred_check_branch
        %1274 = sbr.rel (%p1272) target = $region72
      $region71: #{tpu_custom_call.1} parent=5 // pred_region
        %s1275 = ssub.s32 %s21, 2
        // Predicated region
        $region73: #{tpu_custom_call.1} parent=71 // pred_check
          %p1276 = pneg %p202
        $region74: #{tpu_custom_call.1} parent=71 // pred_check_branch
          %1278 = sbr.rel (%p1276) target = $region76
        $region75: #{tpu_custom_call.1} parent=71 // pred_region
          %s1279 = sand.u32 %s187, 1
          %s1280 = scalar_lea.sflag [#allocation4], %s1279
          %s1281 = sand.u32 %s187, 1
          %s1282 = smul.addr %s1281, 128
          %s1283 = scalar_lea.vmem [#allocation10], %s1282
          %1284 = dma.done %s1280, 2048
        $region76: #{tpu_custom_call.1} parent=71 // pred_fallthru
          _
      $region72: #{tpu_custom_call.1} parent=5 // pred_fallthru
        _
    $region6: #{tpu_custom_call.1} parent=1 // loop_footer
      %s25 = sadd.s32 1, %s21
    $region7: #{tpu_custom_call.1} parent=1 // loop_footer_branch
      %20 = sbr.rel target = $region3
    $region8: #{tpu_custom_call.1} parent=1 // loop_exit
      _
    %1285 = vsyncpa [#allocation3], 1
    %s1286 = scalar_lea.sflag [#allocation3], 1
    %1287 = vsyncpa %s1286, 1
    %1288 = vsyncpa [#allocation6], 1
    %1289 = vsyncpa [#allocation9], 1
    %1290 = vsyncpa [#allocation4], 1
    %s1291 = scalar_lea.sflag [#allocation4], 1
    %1292 = vsyncpa %s1291, 1

</llo_original>
